<compile_context>
chip_gen: v5e
topology: v5e:2x2
jax: 0.10.0
libtpu: 0.0.40
codegen_flags: <defaults>
</compile_context>

<pallas_src>
import functools
import math

import jax
import jax.numpy as jnp
from jax.experimental import pallas as pl
from jax.experimental.pallas import tpu as pltpu

_INV_SQRT2 = 1.0 / math.sqrt(2.0)


def _adapter_kernel(x_ref, wd_ref, bd_ref, wu_ref, bu_ref, scale_ref, o_ref,
                    *, add_residual):
    # x_ref    : (tm, C)   token block (f32 or bf16)
    # wd_ref   : (C, BNp)  down-projection weight (transposed vs torch, resident)
    # bd_ref   : (1, BNp)  down bias (zero-padded to BNp)
    # wu_ref   : (BNp, C)  up-projection weight (zero-padded rows, resident)
    # bu_ref   : (1, C)    up bias
    # scale_ref: (1, 1)    adapter_scale in SMEM (f32)
    x = x_ref[...]                                            # no f32 upcast of I/O

    # down projection on the MXU, f32 accumulation
    h = jnp.dot(x, wd_ref[...], preferred_element_type=jnp.float32)
    h = h + bd_ref[...].astype(jnp.float32)

    # exact erf GELU (matches torch.nn.GELU() default), in f32
    h = 0.5 * h * (1.0 + jax.lax.erf(h * _INV_SQRT2))

    # TODO(synk): dropout(p=0.1) is identity in eval mode; training parity would
    # need pltpu.prng_seed / pltpu.prng_random_bits masking here.

    # up projection on the MXU (cast h to weight dtype for the native path)
    y = jnp.dot(h.astype(wu_ref.dtype), wu_ref[...],
                preferred_element_type=jnp.float32)
    y = y + bu_ref[...].astype(jnp.float32)

    # adapter_scale applied post-matmul in f32 -- hidden under the MXU/DMA path
    y = y * scale_ref[0, 0]

    if add_residual:                       # optional fused `vp + adapter(vp)`
        y = y + x.astype(jnp.float32)

    o_ref[...] = y.astype(o_ref.dtype)


def _round_up(x, m):
    return ((x + m - 1) // m) * m


def _vmem_capacity_bytes():
    try:
        cap = getattr(pltpu.get_tpu_info(), "vmem_capacity_bytes", None)
        if cap:
            return int(cap)
    except Exception:
        pass
    return 64 * 1024 * 1024          # conservative default: v7x per-TC VMEM


def _vmem_bytes(tm, c, bn, x_itemsize, w_itemsize, w_bufs):
    io_tiles = 2 * (tm * c * x_itemsize) * 2          # x + out, double-buffered
    weights = w_bufs * (2 * c * bn + bn + c) * w_itemsize
    interm = tm * bn * 4 + 2 * tm * c * 4             # f32 h + y (+ cast slack)
    return io_tiles + weights + interm


_SINGLE_BUF_WEIGHTS = None           # lazily probed: is pl.Buffered(1) usable?


def _single_buffer_weights_supported():
    """One-time probe (eager, tiny) of pipeline_mode=pl.Buffered(1) support."""
    global _SINGLE_BUF_WEIGHTS
    if _SINGLE_BUF_WEIGHTS is not None:
        return _SINGLE_BUF_WEIGHTS
    try:
        def _copy(a_ref, o_ref):
            o_ref[...] = a_ref[...]
        x = jnp.zeros((8, 128), jnp.float32)
        out = pl.pallas_call(
            _copy,
            out_shape=jax.ShapeDtypeStruct((8, 128), jnp.float32),
            grid_spec=pltpu.PrefetchScalarGridSpec(
                num_scalar_prefetch=0,
                grid=(1,),
                in_specs=[pl.BlockSpec((8, 128), lambda i: (0, 0),
                                       pipeline_mode=pl.Buffered(1))],
                out_specs=pl.BlockSpec((8, 128), lambda i: (0, 0)),
            ),
        )(x)
        jax.block_until_ready(out)
        _SINGLE_BUF_WEIGHTS = True
    except Exception:
        _SINGLE_BUF_WEIGHTS = False
    return _SINGLE_BUF_WEIGHTS


def vp_adapter(vp, wd, bd, wu, bu, scale, *, tm=512, add_residual=False):
    """Fused adapter: (GELU(vp @ Wd + bd) @ Wu + bu) * adapter_scale.

    vp: (B, N, C); wd: (C, BN); bd: (BN,); wu: (BN, C); bu: (C,);
    scale: anything reshapeable to a scalar (the learnable adapter_scale).
    add_residual=True fuses `vp + adapter(vp)` into the epilogue.
    """
    B, N, C = vp.shape
    BN = wd.shape[1]
    M = B * N

    single_buf = _single_buffer_weights_supported()
    w_bufs = 1 if single_buf else 2

    # ---- pad only the tiny bottleneck dim (lane-dense h); never the activation
    BNp = _round_up(BN, 128)
    if BNp != BN:
        wd = jnp.pad(wd, ((0, 0), (0, BNp - BN)))
        bd = jnp.pad(bd, ((0, BNp - BN),))
        wu = jnp.pad(wu, ((0, BNp - BN), (0, 0)))
    bd2 = bd.reshape(1, BNp)
    bu2 = bu.reshape(1, C)
    scale2 = jnp.asarray(scale, jnp.float32).reshape(1, 1)

    x2d = vp.reshape(M, C)               # contiguous reshape: no HBM copy

    # ---- token-tile selection under a generation-aware VMEM budget ----------
    cap = _vmem_capacity_bytes()
    budget = (cap * 3) // 4              # ~96 MiB on v5e/v6e, ~48 MiB on v7x
    tm_eff = max(8, min(_round_up(tm, 8), _round_up(M, 8)))
    while tm_eff > 8 and _vmem_bytes(tm_eff, C, BNp, vp.dtype.itemsize,
                                     wd.dtype.itemsize, w_bufs) > budget:
        tm_eff = max(8, (tm_eff // 2 // 8) * 8)
    # TODO(synk): for very large C on v7x, a 2-D grid (M tiles x output-C tiles
    # with h cached in VMEM scratch under pl.when(j == 0)) would keep tm at 512
    # instead of shrinking here.

    grid = (pl.cdiv(M, tm_eff),)         # ragged last block -- no M padding

    est = _vmem_bytes(tm_eff, C, BNp, vp.dtype.itemsize,
                      wd.dtype.itemsize, w_bufs)
    vmem_limit = int(min(max(int(est * 1.25) + (2 << 20), 32 << 20), cap))

    res_kwargs = {"pipeline_mode": pl.Buffered(1)} if single_buf else {}

    def _resident(shape):                # weights/biases stay in VMEM all run
        return pl.BlockSpec(shape, lambda i: (0, 0), **res_kwargs)

    kernel = functools.partial(_adapter_kernel, add_residual=add_residual)

    out2d = pl.pallas_call(
        kernel,
        out_shape=jax.ShapeDtypeStruct((M, C), vp.dtype),
        grid_spec=pltpu.PrefetchScalarGridSpec(
            num_scalar_prefetch=0,
            grid=grid,
            in_specs=[
                pl.BlockSpec((tm_eff, C), lambda i: (i, 0)),        # x tile
                _resident((C, BNp)),                                # down weight
                _resident((1, BNp)),                                # down bias
                _resident((BNp, C)),                                # up weight
                _resident((1, C)),                                  # up bias
                pl.BlockSpec(memory_space=pltpu.MemorySpace.SMEM),  # scale
            ],
            out_specs=pl.BlockSpec((tm_eff, C), lambda i: (i, 0)),
        ),
        compiler_params=pltpu.CompilerParams(
            dimension_semantics=("parallel",),
            vmem_limit_bytes=vmem_limit,
        ),
    )(x2d, wd, bd2, wu, bu2, scale2)

    return out2d.reshape(B, N, C)


def init_params(key, embedding_dim, adapter_bn=64, dtype=jnp.float32):
    """Deterministic init matching vpAdapter.reset_parameters().

    Torch Linear stores weight as (out, in); we store the transpose (in, out)
    so the kernel computes x @ W directly. For bandwidth-bound deployments on
    v5e/v6e, pass dtype=jnp.bfloat16 here (cast once, not per call).
    """
    bound = 1.0 / math.sqrt(embedding_dim)   # kaiming_uniform_(a=sqrt(5))
    wd = jax.random.uniform(key, (embedding_dim, adapter_bn),
                            minval=-bound, maxval=bound, dtype=dtype)
    bd = jnp.zeros((adapter_bn,), dtype=dtype)
    wu = jnp.zeros((adapter_bn, embedding_dim), dtype=dtype)
    bu = jnp.zeros((embedding_dim,), dtype=dtype)
    scale = jnp.ones((1,), dtype=dtype)       # adapter_scale = ones(1)
    return wd, bd, wu, bu, scale


def _reference(vp, wd, bd, wu, bu, scale):
    h = vp.astype(jnp.float32) @ wd.astype(jnp.float32) + bd.astype(jnp.float32)
    h = 0.5 * h * (1.0 + jax.lax.erf(h * _INV_SQRT2))
    y = h @ wu.astype(jnp.float32) + bu.astype(jnp.float32)
    return y * jnp.asarray(scale, jnp.float32).reshape(())


if __name__ == "__main__":
    key = jax.random.PRNGKey(0)
    k1, k2, k3, k4, k5, k6 = jax.random.split(key, 6)

    B, N, C, BN = 2, 8, 32, 64

    # ---- test 1: f32, non-zero weights (C=32 not lane-aligned, BN->128 pad) --
    vp = jax.random.normal(k1, (B, N, C), dtype=jnp.float32)
    wd = jax.random.normal(k2, (C, BN), dtype=jnp.float32) * 0.1
    bd = jax.random.normal(k3, (BN,), dtype=jnp.float32) * 0.1
    wu = jax.random.normal(k4, (BN, C), dtype=jnp.float32) * 0.1
    bu = jax.random.normal(k5, (C,), dtype=jnp.float32) * 0.1
    scale = jnp.full((1,), 0.7, dtype=jnp.float32)

    out = vp_adapter(vp, wd, bd, wu, bu, scale)
    jax.block_until_ready(out)
    ref = _reference(vp, wd, bd, wu, bu, scale)
    assert out.shape == (B, N, C)
    assert jnp.allclose(out, ref, atol=2e-2, rtol=2e-2), "f32 mismatch vs reference"

    # ---- test 2: module-default init (zero up-projection -> exact zeros) ----
    wd0, bd0, wu0, bu0, sc0 = init_params(k6, C, BN)
    out0 = vp_adapter(vp, wd0, bd0, wu0, bu0, sc0)
    jax.block_until_ready(out0)
    assert jnp.allclose(out0, jnp.zeros_like(out0)), "zero-init adapter must output zeros"

    # ---- test 3: bf16 I/O + ragged token count (M=5, edge-block path) -------
    Bb, Nb = 1, 5
    vp_b32 = jax.random.normal(k1, (Bb, Nb, C), dtype=jnp.float32)
    out_b = vp_adapter(vp_b32.astype(jnp.bfloat16), wd.astype(jnp.bfloat16),
                       bd.astype(jnp.bfloat16), wu.astype(jnp.bfloat16),
                       bu.astype(jnp.bfloat16), scale)
    jax.block_until_ready(out_b)
    ref_b = _reference(vp_b32.astype(jnp.bfloat16), wd.astype(jnp.bfloat16),
                       bd.astype(jnp.bfloat16), wu.astype(jnp.bfloat16),
                       bu.astype(jnp.bfloat16), scale)
    assert out_b.shape == (Bb, Nb, C)
    assert jnp.allclose(out_b.astype(jnp.float32), ref_b, atol=5e-2, rtol=5e-2), \
        "bf16 mismatch vs reference"

    # ---- test 4: fused residual epilogue (optional caller-side fusion) ------
    out_r = vp_adapter(vp, wd, bd, wu, bu, scale, add_residual=True)
    jax.block_until_ready(out_r)
    assert jnp.allclose(out_r, ref + vp, atol=2e-2, rtol=2e-2), "residual mismatch"

    print("KERNEL_OK")
</pallas_src>

<mosaic_0001>
module attributes {stable_mosaic.version = 11 : i64} {
  func.func @_copy(%arg0: i32, %arg1: memref<8x128xf32, #tpu.memory_space<vmem>>, %arg2: memref<8x128xf32, #tpu.memory_space<vmem>>) attributes {dimension_semantics = [#tpu.dimension_semantics<arbitrary>], iteration_bounds = array<i64: 1>, scalar_prefetch = 0 : i64, scratch_operands = 0 : i64, tpu.core_type = #tpu.core_type<tc>, window_params = [{pipeline_mode = #tpu.pipeline_mode<synchronous>, transform_indices = @transform_0, window_bounds = array<i64: 8, 128>}, {pipeline_mode = #tpu.pipeline_mode<synchronous>, transform_indices = @transform_1, window_bounds = array<i64: 8, 128>}]} {
    %c0 = arith.constant 0 : index
    %c0_0 = arith.constant 0 : index
    %0 = vector.load %arg1[%c0, %c0_0] : memref<8x128xf32, #tpu.memory_space<vmem>>, vector<8x128xf32>
    %c0_1 = arith.constant 0 : index
    %c0_2 = arith.constant 0 : index
    %1 = vector.load %arg2[%c0_1, %c0_2] : memref<8x128xf32, #tpu.memory_space<vmem>>, vector<8x128xf32>
    tpu.vector_store %arg2[%c0_1, %c0_2], %0 {strides = array<i32>} : memref<8x128xf32, #tpu.memory_space<vmem>>, vector<8x128xf32>,
    return
  }
  func.func @transform_0(%arg0: i32) -> (i32, i32) {
    %c0_i32 = arith.constant 0 : i32
    %c0_i32_0 = arith.constant 0 : i32
    %c0_i32_1 = arith.constant 0 : i32
    return %c0_i32, %c0_i32_0 : i32, i32
  }
  func.func @transform_1(%arg0: i32) -> (i32, i32) {
    %c0_i32 = arith.constant 0 : i32
    %c0_i32_0 = arith.constant 0 : i32
    %c0_i32_1 = arith.constant 0 : i32
    return %c0_i32, %c0_i32_0 : i32, i32
  }
}

module attributes {stable_mosaic.version = 11 : i64} {
  func.func @_adapter_kernel(%arg0: i32, %arg1: memref<16x32xf32, #tpu.memory_space<vmem>>, %arg2: memref<32x128xf32, #tpu.memory_space<vmem>>, %arg3: memref<1x128xf32, #tpu.memory_space<vmem>>, %arg4: memref<128x32xf32, #tpu.memory_space<vmem>>, %arg5: memref<1x32xf32, #tpu.memory_space<vmem>>, %arg6: memref<1x1xf32, #tpu.memory_space<smem>>, %arg7: memref<16x32xf32, #tpu.memory_space<vmem>>) attributes {dimension_semantics = [#tpu.dimension_semantics<parallel>], iteration_bounds = array<i64: 1>, scalar_prefetch = 0 : i64, scratch_operands = 0 : i64, tpu.core_type = #tpu.core_type<tc>, window_params = [{transform_indices = @transform_0, window_bounds = array<i64: 16, 32>}, {pipeline_mode = #tpu.pipeline_mode<synchronous>, transform_indices = @transform_1, window_bounds = array<i64: 32, 128>}, {pipeline_mode = #tpu.pipeline_mode<synchronous>, transform_indices = @transform_2, window_bounds = array<i64: 1, 128>}, {pipeline_mode = #tpu.pipeline_mode<synchronous>, transform_indices = @transform_3, window_bounds = array<i64: 128, 32>}, {pipeline_mode = #tpu.pipeline_mode<synchronous>, transform_indices = @transform_4, window_bounds = array<i64: 1, 32>}, {transform_indices = @transform_5, window_bounds = array<i64: 1, 1>}, {transform_indices = @transform_6, window_bounds = array<i64: 16, 32>}]} {
    %c0 = arith.constant 0 : index
    %c0_0 = arith.constant 0 : index
    %0 = vector.load %arg1[%c0, %c0_0] : memref<16x32xf32, #tpu.memory_space<vmem>>, vector<16x32xf32>
    %c0_1 = arith.constant 0 : index
    %c0_2 = arith.constant 0 : index
    %1 = vector.load %arg2[%c0_1, %c0_2] : memref<32x128xf32, #tpu.memory_space<vmem>>, vector<32x128xf32>
    %cst = arith.constant dense<0.000000e+00> : vector<16x128xf32>
    %2 = tpu.matmul %0, %1, %cst {dimension_numbers = #tpu.dot_dimension_numbers<[1], [0], [0], [1], [0, 0, 1, 1], [], []>} : vector<16x32xf32>, vector<32x128xf32>, vector<16x128xf32> -> vector<16x128xf32>
    %c0_3 = arith.constant 0 : index
    %c0_4 = arith.constant 0 : index
    %3 = vector.load %arg3[%c0_3, %c0_4] : memref<1x128xf32, #tpu.memory_space<vmem>>, vector<1x128xf32>
    %4 = vector.broadcast %3 : vector<1x128xf32> to vector<16x128xf32>
    %5 = arith.addf %2, %4 : vector<16x128xf32>
    %cst_5 = arith.constant 5.000000e-01 : f32
    %6 = vector.broadcast %cst_5 : f32 to vector<16x128xf32>
    %7 = arith.mulf %6, %5 : vector<16x128xf32>
    %cst_6 = arith.constant 0.707106769 : f32
    %8 = vector.broadcast %cst_6 : f32 to vector<16x128xf32>
    %9 = arith.mulf %5, %8 : vector<16x128xf32>
    %10 = math.erf %9 : vector<16x128xf32>
    %cst_7 = arith.constant 1.000000e+00 : f32
    %11 = vector.broadcast %cst_7 : f32 to vector<16x128xf32>
    %12 = arith.addf %11, %10 : vector<16x128xf32>
    %13 = arith.mulf %7, %12 : vector<16x128xf32>
    %c0_8 = arith.constant 0 : index
    %c0_9 = arith.constant 0 : index
    %14 = vector.load %arg4[%c0_8, %c0_9] : memref<128x32xf32, #tpu.memory_space<vmem>>, vector<128x32xf32>
    %cst_10 = arith.constant dense<0.000000e+00> : vector<16x32xf32>
    %15 = tpu.matmul %13, %14, %cst_10 {dimension_numbers = #tpu.dot_dimension_numbers<[1], [0], [0], [1], [0, 0, 1, 1], [], []>} : vector<16x128xf32>, vector<128x32xf32>, vector<16x32xf32> -> vector<16x32xf32>
    %c0_11 = arith.constant 0 : index
    %c0_12 = arith.constant 0 : index
    %16 = vector.load %arg5[%c0_11, %c0_12] : memref<1x32xf32, #tpu.memory_space<vmem>>, vector<1x32xf32>
    %17 = vector.broadcast %16 : vector<1x32xf32> to vector<16x32xf32>
    %18 = arith.addf %15, %17 : vector<16x32xf32>
    %c0_13 = arith.constant 0 : index
    %c0_14 = arith.constant 0 : index
    %19 = memref.load %arg6[%c0_13, %c0_14] : memref<1x1xf32, #tpu.memory_space<smem>>
    %20 = vector.broadcast %19 : f32 to vector<16x32xf32>
    %21 = arith.mulf %18, %20 : vector<16x32xf32>
    %c0_15 = arith.constant 0 : index
    %c0_16 = arith.constant 0 : index
    %22 = vector.load %arg7[%c0_15, %c0_16] : memref<16x32xf32, #tpu.memory_space<vmem>>, vector<16x32xf32>
    tpu.vector_store %arg7[%c0_15, %c0_16], %21 {strides = array<i32>} : memref<16x32xf32, #tpu.memory_space<vmem>>, vector<16x32xf32>,
    return
  }
  func.func @transform_0(%arg0: i32) -> (i32, i32) {
    %c0_i32 = arith.constant 0 : i32
    %c0_i32_0 = arith.constant 0 : i32
    return %arg0, %c0_i32 : i32, i32
  }
  func.func @transform_1(%arg0: i32) -> (i32, i32) {
    %c0_i32 = arith.constant 0 : i32
    %c0_i32_0 = arith.constant 0 : i32
    %c0_i32_1 = arith.constant 0 : i32
    return %c0_i32, %c0_i32_0 : i32, i32
  }
  func.func @transform_2(%arg0: i32) -> (i32, i32) {
    %c0_i32 = arith.constant 0 : i32
    %c0_i32_0 = arith.constant 0 : i32
    %c0_i32_1 = arith.constant 0 : i32
    return %c0_i32, %c0_i32_0 : i32, i32
  }
  func.func @transform_3(%arg0: i32) -> (i32, i32) {
    %c0_i32 = arith.constant 0 : i32
    %c0_i32_0 = arith.constant 0 : i32
    %c0_i32_1 = arith.constant 0 : i32
    return %c0_i32, %c0_i32_0 : i32, i32
  }
  func.func @transform_4(%arg0: i32) -> (i32, i32) {
    %c0_i32 = arith.constant 0 : i32
    %c0_i32_0 = arith.constant 0 : i32
    %c0_i32_1 = arith.constant 0 : i32
    return %c0_i32, %c0_i32_0 : i32, i32
  }
  func.func @transform_5(%arg0: i32) -> (i32, i32) {
    %c0_i32 = arith.constant 0 : i32
    %c0_i32_0 = arith.constant 0 : i32
    %c0_i32_1 = arith.constant 0 : i32
    return %c0_i32, %c0_i32_0 : i32, i32
  }
  func.func @transform_6(%arg0: i32) -> (i32, i32) {
    %c0_i32 = arith.constant 0 : i32
    %c0_i32_0 = arith.constant 0 : i32
    return %arg0, %c0_i32 : i32, i32
  }
}

</mosaic_0001>

<llo_original>
// kernel: tpu_custom_call.1
$region0: #{tpu_custom_call.1}
  #allocation0 [shape = 'u32[]', space=smem, size = 0x4, offset = 0x4, fixed_abs, tag = 'smem constant byte address 0x4 - core index']
  #allocation1 [shape = 'u32[72,128]{1,0:T(1,128)}', space=vmem, size = 0x9000, scoped, tag = 'internal scratch']
  %s0 = inlined_call_operand.hbm [shape: f32[8,128], index: 0, kind: input, shape index: {}]
  %s1 = inlined_call_operand.hbm [shape: f32[8,128], index: 1, kind: output, shape index: {}]
  %s2 = sld [smem:[#allocation0]]
  $region18: #{tpu_custom_call.1} parent=0
    _
  %s4 = ssub.s32 1, %s2
  %s5 = scalar_select 0, %s4, %s2
  $region1: #{tpu_custom_call.1} parent=0
    #allocation2 [shape = 'u8[4096]{0}', space=vmem, size = 0x1000, scoped, tag = 'input window, operand 0, single buffered']
    #allocation3 [shape = 's32[1]{0}', space=sflag, size = 0x4, scoped, tag = 'scoped memory for tpu_custom_call.1']
    #allocation4 [shape = 's32[1]{0}', space=sflag, size = 0x4, scoped, tag = 'scoped memory for tpu_custom_call.1']
    #allocation5 [shape = 'u8[4096]{0}', space=vmem, size = 0x1000, scoped, tag = 'output window, operand 0, single buffered']
    %6 = vsyncpa [#allocation3], 0
    %7 = vsyncpa [#allocation4], 0
    // Predicated region
    $region2: #{tpu_custom_call.1} parent=1 // pred_check
      _
    $region3: #{tpu_custom_call.1} parent=1 // pred_check_branch
      %9 = sbr.rel (0) target = $region5
    $region4: #{tpu_custom_call.1} parent=1 // pred_region
      %11 = vsyncadd [#allocation3], 0
      %s13 = sshll.u32 %s0, 4
      %s14 = int_to_ptr.hbm [resolvable:$true] %s13
      %s15 = sshll.u32 [#allocation2], 4
      %s16 = int_to_ptr.vmem [resolvable:$true] %s15
      %18 = dma.hbm_to_vmem [thread:$0]  %s14, 128, %s16, [#allocation3]
    $region5: #{tpu_custom_call.1} parent=1 // pred_fallthru
      _
    // Predicated region
    $region6: #{tpu_custom_call.1} parent=1 // pred_check
      _
    $region7: #{tpu_custom_call.1} parent=1 // pred_check_branch
      %20 = sbr.rel (0) target = $region9
    $region8: #{tpu_custom_call.1} parent=1 // pred_region
      %22 = dma.done [#allocation3], 128
    $region9: #{tpu_custom_call.1} parent=1 // pred_fallthru
      _
    %v23 = vld [vmem:[#allocation2] sm:$0xff]
    %24 = vst [vmem:[#allocation5] sm:$0xff] %v23
    // Predicated region
    $region10: #{tpu_custom_call.1} parent=1 // pred_check
      _
    $region11: #{tpu_custom_call.1} parent=1 // pred_check_branch
      %26 = sbr.rel (0) target = $region13
    $region12: #{tpu_custom_call.1} parent=1 // pred_region
      %28 = vsyncadd [#allocation4], 0
      %s30 = sshll.u32 [#allocation5], 4
      %s31 = int_to_ptr.vmem [resolvable:$true] %s30
      %s32 = sshll.u32 %s1, 4
      %s33 = int_to_ptr.hbm [resolvable:$true] %s32
      %35 = dma.vmem_to_hbm [thread:$0]  %s31, 128, %s33, [#allocation4]
    $region13: #{tpu_custom_call.1} parent=1 // pred_fallthru
      _
    // Predicated region
    $region14: #{tpu_custom_call.1} parent=1 // pred_check
      _
    $region15: #{tpu_custom_call.1} parent=1 // pred_check_branch
      %37 = sbr.rel (0) target = $region17
    $region16: #{tpu_custom_call.1} parent=1 // pred_region
      %39 = dma.done [#allocation4], 128
    $region17: #{tpu_custom_call.1} parent=1 // pred_fallthru
      _
    %40 = vsyncpa [#allocation3], 1
    %41 = vsyncpa [#allocation4], 1

// kernel: tpu_custom_call.1
$region0: #{tpu_custom_call.1}
  #allocation0 [shape = 'u32[]', space=smem, size = 0x4, offset = 0x4, fixed_abs, tag = 'smem constant byte address 0x4 - core index']
  #allocation1 [shape = 'u32[72,128]{1,0:T(1,128)}', space=vmem, size = 0x9000, scoped, tag = 'internal scratch']
  #allocation2 [shape = 'f32[1,1]{1,0:T(1,128)S(6)}', space=smem, size = 0x200, scoped, tag = 'scoped memory for tpu_custom_call.1']
  %s0 = inlined_call_operand.vmem [shape: f32[16,32], index: 0, kind: input, shape index: {}]
  %s1 = inlined_call_operand.vmem [shape: f32[32,128], index: 1, kind: input, shape index: {}]
  %s2 = inlined_call_operand.vmem [shape: f32[1,128], index: 2, kind: input, shape index: {}]
  %s3 = inlined_call_operand.vmem [shape: f32[128,32], index: 3, kind: input, shape index: {}]
  %s4 = inlined_call_operand.vmem [shape: f32[1,32], index: 4, kind: input, shape index: {}]
  %s5 = inlined_call_operand.<no memory space> [shape: f32[1,1], index: 5, kind: input, shape index: {}]
  %s6 = inlined_call_operand.hbm [shape: f32[16,32], index: 6, kind: output, shape index: {}]
  %s7 = sld [smem:[#allocation0]]
  $region34: #{tpu_custom_call.1} parent=0
    _
  %s9 = ssub.s32 1, %s7
  %s10 = scalar_select 0, %s9, %s7
  %11 = sst [smem:[#allocation2]] %s5
  $region1: #{tpu_custom_call.1} parent=0
    #allocation3 [shape = 'u8[8192]{0}', space=vmem, size = 0x2000, scoped, tag = 'output window, operand 0, single buffered']
    #allocation4 [shape = 's32[1]{0}', space=sflag, size = 0x4, scoped, tag = 'scoped memory for tpu_custom_call.1']
    %12 = vsyncpa [#allocation4], 0
    // Predicated region
    $region2: #{tpu_custom_call.1} parent=1 // pred_check
      _
    $region3: #{tpu_custom_call.1} parent=1 // pred_check_branch
      %14 = sbr.rel (0) target = $region5
    $region4: #{tpu_custom_call.1} parent=1 // pred_region
      _
    $region5: #{tpu_custom_call.1} parent=1 // pred_fallthru
      _
    // Predicated region
    $region6: #{tpu_custom_call.1} parent=1 // pred_check
      _
    $region7: #{tpu_custom_call.1} parent=1 // pred_check_branch
      %16 = sbr.rel (0) target = $region9
    $region8: #{tpu_custom_call.1} parent=1 // pred_region
      _
    $region9: #{tpu_custom_call.1} parent=1 // pred_fallthru
      _
    // Predicated region
    $region10: #{tpu_custom_call.1} parent=1 // pred_check
      _
    $region11: #{tpu_custom_call.1} parent=1 // pred_check_branch
      %18 = sbr.rel (0) target = $region13
    $region12: #{tpu_custom_call.1} parent=1 // pred_region
      _
    $region13: #{tpu_custom_call.1} parent=1 // pred_fallthru
      _
    // Predicated region
    $region14: #{tpu_custom_call.1} parent=1 // pred_check
      _
    $region15: #{tpu_custom_call.1} parent=1 // pred_check_branch
      %20 = sbr.rel (0) target = $region17
    $region16: #{tpu_custom_call.1} parent=1 // pred_region
      _
    $region17: #{tpu_custom_call.1} parent=1 // pred_fallthru
      _
    // Predicated region
    $region18: #{tpu_custom_call.1} parent=1 // pred_check
      _
    $region19: #{tpu_custom_call.1} parent=1 // pred_check_branch
      %22 = sbr.rel (0) target = $region21
    $region20: #{tpu_custom_call.1} parent=1 // pred_region
      _
    $region21: #{tpu_custom_call.1} parent=1 // pred_fallthru
      _
    // Predicated region
    $region22: #{tpu_custom_call.1} parent=1 // pred_check
      _
    $region23: #{tpu_custom_call.1} parent=1 // pred_check_branch
      %24 = sbr.rel (0) target = $region25
    $region24: #{tpu_custom_call.1} parent=1 // pred_region
      _
    $region25: #{tpu_custom_call.1} parent=1 // pred_fallthru
      _
    %v25 = vld [vmem:[%s0] sm:$0xff]
    %v26 = vld [vmem:[%s0 + $0x8] sm:$0xff]
    %v27 = vld [vmem:[%s1] sm:$0xff]
    %v28 = vld [vmem:[%s1 + $0x8] sm:$0xff]
    %v29 = vld [vmem:[%s1 + $0x10] sm:$0xff]
    %v30 = vld [vmem:[%s1 + $0x18] sm:$0xff]
    %v31 = vld [vmem:[%s2] sm:$0x1]
    %v33 = vperm.slane %v31, 0
    %vm35 = vcmask 261120
    %v37 = vsel %vm35, %v25, 0
    %v40 = vsel %vm35, %v26, 0
    %42 = vmatpush.msra.mxu0 0.0
    %43 = vmatpush.msra.mxu0 0.0
    %44 = vmatpush.msra.mxu0 0.0
    %45 = vmatpush.msra.mxu0 0.0
    %46 = vmatpush.msra.mxu0 0.0
    %47 = vmatpush.msra.mxu0 0.0
    %48 = vmatpush.msra.mxu0 0.0
    %49 = vmatpush.msra.mxu0 0.0
    %50 = vmatpush.msra.mxu0 0.0
    %51 = vmatpush.msra.mxu0 0.0
    %52 = vmatpush.msra.mxu0 0.0
    %53 = vmatpush.msra.mxu0 0.0
    %54 = vmatpush.msra.mxu0 %v30
    %55 = vmatpush.msra.mxu0 %v29
    %56 = vmatpush.msra.mxu0 %v28
    %57 = vmatpush.msra.mxu0 %v27
    %58 = vmatmul.f32.gmra.mxu0 %v37
    %v59 = vpop.f32.mrf.mxu0
    %v60 = vadd.f32 %v33, %v59
    %61 = vmatmul.f32.gmra.mxu0 %v40
    %v62 = vpop.f32.mrf.mxu0
    %v63 = vadd.f32 %v33, %v62
    %64 = vdwg.mxu0
    %v65 = vmul.f32 %v60, 0.5
    %v66 = vmul.f32 %v63, 0.5
    %v67 = vmul.f32 %v60, 0.70710677
    %v68 = vmul.f32 %v63, 0.70710677
    %v69 = vmul.f32 %v67, %v67
    %v70 = vmin.f32 16.0, %v69
    %v71 = vmul.f32 %v70, 2.1237322e-06
    %v72 = vadd.f32 %v71, 0.00028619796
    %v73 = vmul.f32 %v70, %v72
    %v74 = vadd.f32 %v73, 0.0036580483
    %v75 = vmul.f32 %v70, %v74
    %v76 = vadd.f32 %v75, 0.05243302
    %v77 = vmul.f32 %v70, %v76
    %v78 = vadd.f32 %v77, 0.18741608
    %v79 = vmul.f32 %v70, %v78
    %v80 = vadd.f32 %v79, 1.1283791
    %v81 = vmul.f32 %v67, %v80
    %v82 = vmul.f32 %v70, 3.8918573e-05
    %v83 = vadd.f32 %v82, 0.001143296
    %v84 = vmul.f32 %v70, %v83
    %v85 = vadd.f32 %v84, 0.014752088
    %v86 = vmul.f32 %v70, %v85
    %v87 = vadd.f32 %v86, 0.112945676
    %v88 = vmul.f32 %v70, %v87
    %v89 = vadd.f32 %v88, 0.4994258
    %v90 = vmul.f32 %v70, %v89
    %v91 = vadd.f32 %v90, 1.0
    %v92 = vrcp.pop %v91
    %v93 = vmul.f32 %v91, %v92
    %v94 = vsub.f32 1.0, %v93
    %v95 = vmul.f32 %v92, %v94
    %v96 = vadd.f32 %v92, %v95
    %vm97 = vweird.f32 %v91
    %vm98 = vweird.f32 %v92
    %vm99 = vmor %vm97, %vm98
    %v100 = vsel %vm99, %v92, %v96
    %v101 = vand.u32 2147483647, %v91
    %vm102 = vcmp.eq.f32.partialorder %v101, 8.507059e+37
    %v103 = vand.u32 %v91, 2147483648
    %v104 = vor.u32 1.1754944e-38, %v103
    %v105 = vsel %vm102, %v104, %v100
    %v106 = vmul.f32 %v81, %v105
    %v107 = vmin.f32 %v106, 1.0
    %v108 = vmax.f32 %v107, -1.0
    %v109 = vmul.f32 %v68, %v68
    %v110 = vmin.f32 16.0, %v109
    %v111 = vmul.f32 %v110, 2.1237322e-06
    %v112 = vadd.f32 %v111, 0.00028619796
    %v113 = vmul.f32 %v110, %v112
    %v114 = vadd.f32 %v113, 0.0036580483
    %v115 = vmul.f32 %v110, %v114
    %v116 = vadd.f32 %v115, 0.05243302
    %v117 = vmul.f32 %v110, %v116
    %v118 = vadd.f32 %v117, 0.18741608
    %v119 = vmul.f32 %v110, %v118
    %v120 = vadd.f32 %v119, 1.1283791
    %v121 = vmul.f32 %v68, %v120
    %v122 = vmul.f32 %v110, 3.8918573e-05
    %v123 = vadd.f32 %v122, 0.001143296
    %v124 = vmul.f32 %v110, %v123
    %v125 = vadd.f32 %v124, 0.014752088
    %v126 = vmul.f32 %v110, %v125
    %v127 = vadd.f32 %v126, 0.112945676
    %v128 = vmul.f32 %v110, %v127
    %v129 = vadd.f32 %v128, 0.4994258
    %v130 = vmul.f32 %v110, %v129
    %v131 = vadd.f32 %v130, 1.0
    %v132 = vrcp.pop %v131
    %v133 = vmul.f32 %v131, %v132
    %v134 = vsub.f32 1.0, %v133
    %v135 = vmul.f32 %v132, %v134
    %v136 = vadd.f32 %v132, %v135
    %vm137 = vweird.f32 %v131
    %vm138 = vweird.f32 %v132
    %vm139 = vmor %vm137, %vm138
    %v140 = vsel %vm139, %v132, %v136
    %v141 = vand.u32 2147483647, %v131
    %vm142 = vcmp.eq.f32.partialorder %v141, 8.507059e+37
    %v143 = vand.u32 %v131, 2147483648
    %v144 = vor.u32 1.1754944e-38, %v143
    %v145 = vsel %vm142, %v144, %v140
    %v146 = vmul.f32 %v121, %v145
    %v147 = vmin.f32 %v146, 1.0
    %v148 = vmax.f32 %v147, -1.0
    %v149 = vadd.f32 %v108, 1.0
    %v150 = vadd.f32 %v148, 1.0
    %v151 = vmul.f32 %v65, %v149
    %v152 = vmul.f32 %v66, %v150
    %v153 = vld [vmem:[%s3] sm:$0xff]
    %v154 = vld [vmem:[%s3 + $0x8] sm:$0xff]
    %v155 = vld [vmem:[%s3 + $0x10] sm:$0xff]
    %v156 = vld [vmem:[%s3 + $0x18] sm:$0xff]
    %v157 = vld [vmem:[%s3 + $0x20] sm:$0xff]
    %v158 = vld [vmem:[%s3 + $0x28] sm:$0xff]
    %v159 = vld [vmem:[%s3 + $0x30] sm:$0xff]
    %v160 = vld [vmem:[%s3 + $0x38] sm:$0xff]
    %v161 = vld [vmem:[%s3 + $0x40] sm:$0xff]
    %v162 = vld [vmem:[%s3 + $0x48] sm:$0xff]
    %v163 = vld [vmem:[%s3 + $0x50] sm:$0xff]
    %v164 = vld [vmem:[%s3 + $0x58] sm:$0xff]
    %v165 = vld [vmem:[%s3 + $0x60] sm:$0xff]
    %v166 = vld [vmem:[%s3 + $0x68] sm:$0xff]
    %v167 = vld [vmem:[%s3 + $0x70] sm:$0xff]
    %v168 = vld [vmem:[%s3 + $0x78] sm:$0xff]
    %v169 = vld [vmem:[%s4] sm:$0x1]
    %v171 = vperm.slane %v169, 0
    %173 = vmatpush.msra.mxu0 %v168
    %174 = vmatpush.msra.mxu0 %v167
    %175 = vmatpush.msra.mxu0 %v166
    %176 = vmatpush.msra.mxu0 %v165
    %177 = vmatpush.msra.mxu0 %v164
    %178 = vmatpush.msra.mxu0 %v163
    %179 = vmatpush.msra.mxu0 %v162
    %180 = vmatpush.msra.mxu0 %v161
    %181 = vmatpush.msra.mxu0 %v160
    %182 = vmatpush.msra.mxu0 %v159
    %183 = vmatpush.msra.mxu0 %v158
    %184 = vmatpush.msra.mxu0 %v157
    %185 = vmatpush.msra.mxu0 %v156
    %186 = vmatpush.msra.mxu0 %v155
    %187 = vmatpush.msra.mxu0 %v154
    %188 = vmatpush.msra.mxu0 %v153
    %189 = vmatmul.f32.gmra.mxu0 %v151
    %v190 = vpop.f32.mrf.mxu0
    %v191 = vadd.f32 %v171, %v190
    %192 = vmatmul.f32.gmra.mxu0 %v152
    %v193 = vpop.f32.mrf.mxu0
    %v194 = vadd.f32 %v171, %v193
    %195 = vdwg.mxu0
    %s196 = sld [smem:[#allocation2]]
    %v197 = vstv %s196
    %v198 = vmul.f32 %v191, %v197
    %v199 = vmul.f32 %v194, %v197
    %200 = vst.msk [vmem:[#allocation3] sm:$0xff] %vm35, %v198
    %201 = vst.msk [vmem:[#allocation3 + $0x8] sm:$0xff] %vm35, %v199
    // Predicated region
    $region26: #{tpu_custom_call.1} parent=1 // pred_check
      _
    $region27: #{tpu_custom_call.1} parent=1 // pred_check_branch
      %203 = sbr.rel (0) target = $region29
    $region28: #{tpu_custom_call.1} parent=1 // pred_region
      %205 = vsyncadd [#allocation4], 0
      %s206 = sshll.u32 [#allocation3], 4
      %s207 = int_to_ptr.vmem [resolvable:$true] %s206
      %s208 = sshll.u32 %s6, 4
      %s209 = int_to_ptr.hbm [resolvable:$true] %s208
      %214 = dma.vmem_to_hbm [thread:$0]  %s207, 256, %s209, [#allocation4], 128, 128, 8
    $region29: #{tpu_custom_call.1} parent=1 // pred_fallthru
      _
    // Predicated region
    $region30: #{tpu_custom_call.1} parent=1 // pred_check
      _
    $region31: #{tpu_custom_call.1} parent=1 // pred_check_branch
      %216 = sbr.rel (0) target = $region33
    $region32: #{tpu_custom_call.1} parent=1 // pred_region
      %218 = dma.done [#allocation4], 256
    $region33: #{tpu_custom_call.1} parent=1 // pred_fallthru
      _
    %219 = vsyncpa [#allocation4], 1

</llo_original>
